<compile_context>
chip_gen: v7x
topology: tpu7x:2x2x1
jax: 0.10.0
libtpu: 0.0.40
codegen_flags: <defaults>
</compile_context>

<pallas_src>
import functools

import jax
import jax.numpy as jnp
from jax.experimental import pallas as pl
from jax.experimental.pallas import tpu as pltpu


# ------------------------------ slab layout ---------------------------------


def _round_up(n, m):
    return ((n + m - 1) // m) * m


def _slab_layout(input_size, hidden_size, num_layers, output_dim):
    """Row/lane layout of the single packed parameter slab (bf16).

    Each section's row start is a multiple of 16 (bf16 sublane tile), so every
    in-kernel static slice is tile-aligned.
    """
    H = hidden_size
    lanes = _round_up(max(6 * H, output_dim, 128), 128)
    fc_lanes = min(lanes, _round_up(max(output_dim, 1), 128))
    layout = {}
    r = 0
    for layer in range(num_layers):
        in_l = input_size if layer == 0 else 2 * H
        layout[f"w{layer}"] = r
        r += _round_up(in_l, 16)
        layout[f"b{layer}"] = r
        r += 16
    layout["wfc"] = r
    r += _round_up(2 * H, 16)
    layout["bfc"] = r
    r += 16
    total_rows = _round_up(r, 16)
    return layout, total_rows, lanes, fc_lanes


# ----------------------------- fused Pallas kernel ---------------------------


def _fused_forward_kernel(x_ref, slab_ref, out_ref, *, hidden_size, num_layers,
                          input_size, output_dim, layout, fc_lanes):
    """x: (B, in0) f32, slab: packed bf16 params, out: (B, out_dim) f32."""
    H = hidden_size
    act = x_ref[...].astype(jnp.bfloat16)                       # bf16 for the MXU

    for layer in range(num_layers):
        in_l = input_size if layer == 0 else 2 * H
        wr = layout[f"w{layer}"]
        br = layout[f"b{layer}"]
        w = slab_ref[wr:wr + in_l, :]                            # (in_l, lanes) bf16
        b = slab_ref[br:br + 1, :].astype(jnp.float32)           # (1, lanes)

        # One MXU matmul for BOTH directions & all live gates.
        gates = jnp.dot(act, w, preferred_element_type=jnp.float32) + b

        # Columns: [i_fwd|i_rev | o_fwd|o_rev | g_fwd|g_rev | 0-pad]
        sig = jax.nn.sigmoid(gates[:, :4 * H])                   # i & o, both dirs (128 lanes)
        i_g = sig[:, :2 * H]
        o_g = sig[:, 2 * H:4 * H]
        g_g = jnp.tanh(gates[:, 4 * H:6 * H])
        # seq_len == 1, c0 == 0  =>  c = i*g (forget gate dropped at pack time).
        h = o_g * jnp.tanh(i_g * g_g)                            # (B, 2H) = [h_fwd | h_rev]
        act = h.astype(jnp.bfloat16)

    # Dropout(0.5): eval-mode identity.
    wfr = layout["wfc"]
    bfr = layout["bfc"]
    wfc = slab_ref[wfr:wfr + 2 * H, :fc_lanes]                   # (2H, 128) bf16
    bfc = slab_ref[bfr:bfr + 1, :fc_lanes].astype(jnp.float32)
    out = jnp.dot(act, wfc, preferred_element_type=jnp.float32) + bfc
    out_ref[...] = out[:, :output_dim].astype(out_ref.dtype)


def lstm_discriminator_forward(x, slab, *, input_size, hidden_size, num_layers,
                               output_dim):
    """x: (B, ...) -> (B, output_dim). `slab` comes from pack_params()."""
    B = x.shape[0]
    xt = x.reshape(B, -1).astype(jnp.float32)                    # x.view(len(x), 1, -1)
    assert xt.shape[1] == input_size

    layout, total_rows, lanes, fc_lanes = _slab_layout(
        input_size, hidden_size, num_layers, output_dim)
    assert slab.shape == (total_rows, lanes)

    H = hidden_size
    gw = 6 * H
    flops = 2 * B * (input_size * gw + (num_layers - 1) * 2 * H * gw
                     + 2 * H * output_dim)
    transcendentals = B * num_layers * 8 * H
    bytes_accessed = xt.size * 4 + slab.size * 2 + B * output_dim * 4

    kernel = functools.partial(
        _fused_forward_kernel, hidden_size=H, num_layers=num_layers,
        input_size=input_size, output_dim=output_dim, layout=layout,
        fc_lanes=fc_lanes)

    return pl.pallas_call(
        kernel,
        out_shape=jax.ShapeDtypeStruct((B, output_dim), jnp.float32),
        in_specs=[pl.BlockSpec(memory_space=pltpu.MemorySpace.VMEM)] * 2,
        out_specs=pl.BlockSpec(memory_space=pltpu.MemorySpace.VMEM),
        cost_estimate=pl.CostEstimate(flops=int(flops),
                                      transcendentals=int(transcendentals),
                                      bytes_accessed=int(bytes_accessed)),
    )(xt, slab)


# ------------------------------ parameter handling ----------------------------


def init_params(key, input_size, hidden_size, num_layers, output_dim):
    """PyTorch-layout weights, U(-1/sqrt(H), 1/sqrt(H)) like nn.LSTM / nn.Linear."""
    params = {"lstm": [], "fc": None}
    k = 1.0 / float(hidden_size) ** 0.5
    keys = jax.random.split(key, num_layers * 2 * 4 + 2)
    idx = 0
    for layer in range(num_layers):
        in_size = input_size if layer == 0 else 2 * hidden_size
        layer_params = []
        for _direction in range(2):
            w_ih = jax.random.uniform(keys[idx], (4 * hidden_size, in_size),
                                      minval=-k, maxval=k); idx += 1
            w_hh = jax.random.uniform(keys[idx], (4 * hidden_size, hidden_size),
                                      minval=-k, maxval=k); idx += 1
            b_ih = jax.random.uniform(keys[idx], (4 * hidden_size,),
                                      minval=-k, maxval=k); idx += 1
            b_hh = jax.random.uniform(keys[idx], (4 * hidden_size,),
                                      minval=-k, maxval=k); idx += 1
            layer_params.append((w_ih, w_hh, b_ih, b_hh))
        params["lstm"].append(layer_params)
    kf = 1.0 / float(2 * hidden_size) ** 0.5
    fc_w = jax.random.uniform(keys[idx], (output_dim, 2 * hidden_size),
                              minval=-kf, maxval=kf); idx += 1
    fc_b = jax.random.uniform(keys[idx], (output_dim,), minval=-kf, maxval=kf)
    params["fc"] = (fc_w, fc_b)
    return params


def pack_params(params, input_size, hidden_size, num_layers, output_dim):
    """One-time (off the forward path) packing into a single bf16 slab:
       - W_ih transposed to (in, H) blocks, gate-TYPE-contiguous columns
         [i_fwd|i_rev | o_fwd|o_rev | g_fwd|g_rev]; forget gate & W_hh dropped
         (dead for seq_len==1, h0=c0=0).
       - b_ih + b_hh folded, same column order.
       - FC weight transposed to (2H, out), bias folded in.
       All sections 16-row aligned, lane width a multiple of 128."""
    H = hidden_size
    layout, total_rows, lanes, _ = _slab_layout(
        input_size, hidden_size, num_layers, output_dim)
    slab = jnp.zeros((total_rows, lanes), jnp.float32)

    def gate_w(w_ih, gidx):                     # -> (in, H)
        return w_ih[gidx * H:(gidx + 1) * H, :].T

    def gate_b(b_ih, b_hh, gidx):               # -> (H,)
        return b_ih[gidx * H:(gidx + 1) * H] + b_hh[gidx * H:(gidx + 1) * H]

    # PyTorch gate order along the 4H dim: i=0, f=1, g=2, o=3.
    for layer in range(num_layers):
        in_l = input_size if layer == 0 else 2 * H
        (wf, _whf, bif, bhf) = params["lstm"][layer][0]   # fwd
        (wr, _whr, bir, bhr) = params["lstm"][layer][1]   # rev
        w_packed = jnp.concatenate(
            [gate_w(wf, 0), gate_w(wr, 0),      # i
             gate_w(wf, 3), gate_w(wr, 3),      # o
             gate_w(wf, 2), gate_w(wr, 2)],     # g
            axis=1)                                           # (in_l, 6H)
        b_packed = jnp.concatenate(
            [gate_b(bif, bhf, 0), gate_b(bir, bhr, 0),
             gate_b(bif, bhf, 3), gate_b(bir, bhr, 3),
             gate_b(bif, bhf, 2), gate_b(bir, bhr, 2)])       # (6H,)
        r = layout[f"w{layer}"]
        slab = slab.at[r:r + in_l, :6 * H].set(w_packed)
        slab = slab.at[layout[f"b{layer}"], :6 * H].set(b_packed)

    fc_w, fc_b = params["fc"]
    r = layout["wfc"]
    slab = slab.at[r:r + 2 * H, :output_dim].set(fc_w.T)
    slab = slab.at[layout["bfc"], :output_dim].set(fc_b)
    return slab.astype(jnp.bfloat16)


# --------------------------- pure-JAX references ------------------------------


def _reference_forward(x, params, hidden_size, num_layers, weight_dtype=jnp.float32):
    """Original-module semantics. With weight_dtype=bfloat16 it additionally
    simulates the kernel's bf16 weight/activation quantization (math stays f32)."""
    def q(a):
        return a.astype(weight_dtype).astype(jnp.float32)

    B = x.shape[0]
    xt = x.reshape(B, 1, -1)[:, 0, :]
    # TODO(synk): the torch code builds h0/c0 with shape (num_layers, B, H), which
    # mismatches a bidirectional LSTM (needs 2*num_layers); as in the original
    # translation we use the intended all-zero initial state per cell.
    h0 = jnp.zeros((B, hidden_size), jnp.float32)
    c0 = jnp.zeros((B, hidden_size), jnp.float32)
    layer_in = xt
    H = hidden_size
    for layer in range(num_layers):
        hs = []
        for direction in range(2):
            w_ih, w_hh, b_ih, b_hh = params["lstm"][layer][direction]
            gates = q(layer_in) @ q(w_ih).T + h0 @ q(w_hh).T + q(b_ih + b_hh)
            i = jax.nn.sigmoid(gates[:, 0 * H:1 * H])
            f = jax.nn.sigmoid(gates[:, 1 * H:2 * H])
            g = jnp.tanh(gates[:, 2 * H:3 * H])
            o = jax.nn.sigmoid(gates[:, 3 * H:4 * H])
            c = f * c0 + i * g
            hs.append(o * jnp.tanh(c))
        layer_in = jnp.concatenate(hs, axis=-1)
    fc_w, fc_b = params["fc"]
    return q(layer_in) @ q(fc_w).T + q(fc_b)


# ---------------------------------- main --------------------------------------


if __name__ == "__main__":
    batch = 4
    input_size = 64          # 8 * 8 flattened by x.view(len(x), 1, -1)
    hidden_size = 32
    num_layers = 2
    output_dim = 2

    key = jax.random.PRNGKey(0)
    kx, kp = jax.random.split(key)
    x = jax.random.normal(kx, (batch, 8, 8), dtype=jnp.float32)
    params = init_params(kp, input_size, hidden_size, num_layers, output_dim)
    slab = pack_params(params, input_size, hidden_size, num_layers, output_dim)

    out = lstm_discriminator_forward(
        x, slab, input_size=input_size, hidden_size=hidden_size,
        num_layers=num_layers, output_dim=output_dim)
    out = jax.block_until_ready(out)
    assert out.shape == (batch, output_dim), out.shape

    # Tight check: reference that simulates the kernel's bf16 weight/act cast.
    ref_bf16 = _reference_forward(x, params, hidden_size, num_layers,
                                  weight_dtype=jnp.bfloat16)
    assert jnp.allclose(out, ref_bf16, atol=1e-3, rtol=1e-3), (out, ref_bf16)

    # Loose check vs the pure-f32 original semantics (difference bounded by the
    # intentional bf16 weight quantization).
    ref_f32 = _reference_forward(x, params, hidden_size, num_layers)
    assert jnp.allclose(out, ref_f32, atol=5e-2, rtol=5e-2), (out, ref_f32)

    print("KERNEL_OK")
</pallas_src>

<mosaic_0001>
module attributes {stable_mosaic.version = 11 : i64} {
  func.func @_fused_forward_kernel(%arg0: memref<4x64xf32, #tpu.memory_space<vmem>>, %arg1: memref<240x256xbf16, #tpu.memory_space<vmem>>, %arg2: memref<4x2xf32, #tpu.memory_space<vmem>>) attributes {dimension_semantics = [], scalar_prefetch = 0 : i64, scratch_operands = 0 : i64, tpu.core_type = #tpu.core_type<tc>} {
    %c0 = arith.constant 0 : index
    %c0_0 = arith.constant 0 : index
    %0 = vector.load %arg0[%c0, %c0_0] : memref<4x64xf32, #tpu.memory_space<vmem>>, vector<4x64xf32>
    %1 = arith.truncf %0 : vector<4x64xf32> to vector<4x64xbf16>
    %c0_1 = arith.constant 0 : index
    %c0_2 = arith.constant 0 : index
    %2 = vector.load %arg1[%c0_1, %c0_2] : memref<240x256xbf16, #tpu.memory_space<vmem>>, vector<64x256xbf16>
    %c64 = arith.constant 64 : index
    %c0_3 = arith.constant 0 : index
    %3 = vector.load %arg1[%c64, %c0_3] : memref<240x256xbf16, #tpu.memory_space<vmem>>, vector<1x256xbf16>
    %4 = arith.extf %3 : vector<1x256xbf16> to vector<1x256xf32>
    %cst = arith.constant dense<0.000000e+00> : vector<4x256xf32>
    %5 = tpu.matmul %1, %2, %cst {dimension_numbers = #tpu.dot_dimension_numbers<[1], [0], [0], [1], [0, 0, 1, 1], [], []>} : vector<4x64xbf16>, vector<64x256xbf16>, vector<4x256xf32> -> vector<4x256xf32>
    %6 = vector.broadcast %4 : vector<1x256xf32> to vector<4x256xf32>
    %7 = arith.addf %5, %6 : vector<4x256xf32>
    %8 = vector.extract_strided_slice %7 {offsets = [0, 0], sizes = [4, 128], strides = [1, 1]} : vector<4x256xf32> to vector<4x128xf32>
    %9 = arith.negf %8 : vector<4x128xf32>
    %10 = math.exp %9 : vector<4x128xf32>
    %cst_4 = arith.constant 1.000000e+00 : f32
    %11 = vector.broadcast %cst_4 : f32 to vector<4x128xf32>
    %12 = arith.addf %11, %10 : vector<4x128xf32>
    %13 = arith.divf %11, %12 : vector<4x128xf32>
    %14 = vector.extract_strided_slice %13 {offsets = [0, 0], sizes = [4, 64], strides = [1, 1]} : vector<4x128xf32> to vector<4x64xf32>
    %15 = vector.extract_strided_slice %13 {offsets = [0, 64], sizes = [4, 64], strides = [1, 1]} : vector<4x128xf32> to vector<4x64xf32>
    %16 = vector.extract_strided_slice %7 {offsets = [0, 128], sizes = [4, 64], strides = [1, 1]} : vector<4x256xf32> to vector<4x64xf32>
    %17 = math.tanh %16 : vector<4x64xf32>
    %18 = arith.mulf %14, %17 : vector<4x64xf32>
    %19 = math.tanh %18 : vector<4x64xf32>
    %20 = arith.mulf %15, %19 : vector<4x64xf32>
    %21 = arith.truncf %20 : vector<4x64xf32> to vector<4x64xbf16>
    %c80 = arith.constant 80 : index
    %c0_5 = arith.constant 0 : index
    %22 = vector.load %arg1[%c80, %c0_5] : memref<240x256xbf16, #tpu.memory_space<vmem>>, vector<64x256xbf16>
    %c144 = arith.constant 144 : index
    %c0_6 = arith.constant 0 : index
    %23 = vector.load %arg1[%c144, %c0_6] : memref<240x256xbf16, #tpu.memory_space<vmem>>, vector<1x256xbf16>
    %24 = arith.extf %23 : vector<1x256xbf16> to vector<1x256xf32>
    %cst_7 = arith.constant dense<0.000000e+00> : vector<4x256xf32>
    %25 = tpu.matmul %21, %22, %cst_7 {dimension_numbers = #tpu.dot_dimension_numbers<[1], [0], [0], [1], [0, 0, 1, 1], [], []>} : vector<4x64xbf16>, vector<64x256xbf16>, vector<4x256xf32> -> vector<4x256xf32>
    %26 = vector.broadcast %24 : vector<1x256xf32> to vector<4x256xf32>
    %27 = arith.addf %25, %26 : vector<4x256xf32>
    %28 = vector.extract_strided_slice %27 {offsets = [0, 0], sizes = [4, 128], strides = [1, 1]} : vector<4x256xf32> to vector<4x128xf32>
    %29 = arith.negf %28 : vector<4x128xf32>
    %30 = math.exp %29 : vector<4x128xf32>
    %cst_8 = arith.constant 1.000000e+00 : f32
    %31 = vector.broadcast %cst_8 : f32 to vector<4x128xf32>
    %32 = arith.addf %31, %30 : vector<4x128xf32>
    %33 = arith.divf %31, %32 : vector<4x128xf32>
    %34 = vector.extract_strided_slice %33 {offsets = [0, 0], sizes = [4, 64], strides = [1, 1]} : vector<4x128xf32> to vector<4x64xf32>
    %35 = vector.extract_strided_slice %33 {offsets = [0, 64], sizes = [4, 64], strides = [1, 1]} : vector<4x128xf32> to vector<4x64xf32>
    %36 = vector.extract_strided_slice %27 {offsets = [0, 128], sizes = [4, 64], strides = [1, 1]} : vector<4x256xf32> to vector<4x64xf32>
    %37 = math.tanh %36 : vector<4x64xf32>
    %38 = arith.mulf %34, %37 : vector<4x64xf32>
    %39 = math.tanh %38 : vector<4x64xf32>
    %40 = arith.mulf %35, %39 : vector<4x64xf32>
    %41 = arith.truncf %40 : vector<4x64xf32> to vector<4x64xbf16>
    %c160 = arith.constant 160 : index
    %c0_9 = arith.constant 0 : index
    %42 = vector.load %arg1[%c160, %c0_9] : memref<240x256xbf16, #tpu.memory_space<vmem>>, vector<64x128xbf16>
    %c224 = arith.constant 224 : index
    %c0_10 = arith.constant 0 : index
    %43 = vector.load %arg1[%c224, %c0_10] : memref<240x256xbf16, #tpu.memory_space<vmem>>, vector<1x128xbf16>
    %44 = arith.extf %43 : vector<1x128xbf16> to vector<1x128xf32>
    %cst_11 = arith.constant dense<0.000000e+00> : vector<4x128xf32>
    %45 = tpu.matmul %41, %42, %cst_11 {dimension_numbers = #tpu.dot_dimension_numbers<[1], [0], [0], [1], [0, 0, 1, 1], [], []>} : vector<4x64xbf16>, vector<64x128xbf16>, vector<4x128xf32> -> vector<4x128xf32>
    %46 = vector.broadcast %44 : vector<1x128xf32> to vector<4x128xf32>
    %47 = arith.addf %45, %46 : vector<4x128xf32>
    %48 = vector.extract_strided_slice %47 {offsets = [0, 0], sizes = [4, 2], strides = [1, 1]} : vector<4x128xf32> to vector<4x2xf32>
    %c0_12 = arith.constant 0 : index
    %c0_13 = arith.constant 0 : index
    %49 = vector.load %arg2[%c0_12, %c0_13] : memref<4x2xf32, #tpu.memory_space<vmem>>, vector<4x2xf32>
    tpu.vector_store %arg2[%c0_12, %c0_13], %48 {strides = array<i32>} : memref<4x2xf32, #tpu.memory_space<vmem>>, vector<4x2xf32>,
    return
  }
}

</mosaic_0001>

<llo_original>
// kernel: tpu_custom_call.1
$region0: #{tpu_custom_call.1}
  #allocation0 [shape = 'u32[]', space=smem, size = 0x4, offset = 0x4, fixed_abs, tag = 'smem constant byte address 0x4 - core index']
  #allocation1 [shape = 'u32[144,128]{1,0:T(1,128)}', space=vmem, size = 0x12000, scoped, tag = 'internal scratch']
  %s0 = inlined_call_operand.hbm [shape: f32[4,64], index: 0, kind: input, shape index: {}]
  %s1 = inlined_call_operand.hbm [shape: bf16[240,256], index: 1, kind: input, shape index: {}]
  %s2 = inlined_call_operand.vmem [shape: f32[4,2], index: 2, kind: output, shape index: {}]
  %s3 = sld [smem:[#allocation0]]
  $region26: #{tpu_custom_call.1} parent=0
    _
  %s5 = ssub.s32 1, %s3
  %s6 = scalar_select 0, %s5, %s3
  $region1: #{tpu_custom_call.1} parent=0
    #allocation2 [shape = 'u8[2048]{0}', space=vmem, size = 0x800, scoped, tag = 'input window, operand 0, single buffered']
    #allocation3 [shape = 's32[1]{0}', space=sflag, size = 0x4, scoped, tag = 'scoped memory for tpu_custom_call.1']
    #allocation4 [shape = 'u8[122880]{0}', space=vmem, size = 0x1e000, scoped, tag = 'input window, operand 1, single buffered']
    #allocation5 [shape = 's32[1]{0}', space=sflag, size = 0x4, scoped, tag = 'scoped memory for tpu_custom_call.1']
    %7 = vsyncpa [#allocation3], 0
    %8 = vsyncpa [#allocation5], 0
    // Predicated region
    $region2: #{tpu_custom_call.1} parent=1 // pred_check
      _
    $region3: #{tpu_custom_call.1} parent=1 // pred_check_branch
      %10 = sbr.rel (0) target = $region5
    $region4: #{tpu_custom_call.1} parent=1 // pred_region
      %s12 = ssub.s32 64, 64
      %13 = vsyncadd [#allocation3], %s12
      %s15 = sshll.u32 [#allocation2], 4
      %s16 = int_to_ptr.vmem [resolvable:$true] %s15
      %18 = dma.hbm_to_vmem [thread:$0]  %s0, 64, %s16, [#allocation3]
    $region5: #{tpu_custom_call.1} parent=1 // pred_fallthru
      _
    // Predicated region
    $region6: #{tpu_custom_call.1} parent=1 // pred_check
      _
    $region7: #{tpu_custom_call.1} parent=1 // pred_check_branch
      %20 = sbr.rel (0) target = $region9
    $region8: #{tpu_custom_call.1} parent=1 // pred_region
      %s22 = ssub.s32 3840, 3840
      %23 = vsyncadd [#allocation5], %s22
      %s24 = sshll.u32 [#allocation4], 4
      %s25 = int_to_ptr.vmem [resolvable:$true] %s24
      %30 = dma.hbm_to_vmem [thread:$0]  %s1, 3840, %s25, [#allocation5], 128, 128, 8
    $region9: #{tpu_custom_call.1} parent=1 // pred_fallthru
      _
    // Predicated region
    $region10: #{tpu_custom_call.1} parent=1 // pred_check
      _
    $region11: #{tpu_custom_call.1} parent=1 // pred_check_branch
      %32 = sbr.rel (0) target = $region13
    $region12: #{tpu_custom_call.1} parent=1 // pred_region
      %33 = dma.done [#allocation3], 64
    $region13: #{tpu_custom_call.1} parent=1 // pred_fallthru
      _
    // Predicated region
    $region14: #{tpu_custom_call.1} parent=1 // pred_check
      _
    $region15: #{tpu_custom_call.1} parent=1 // pred_check_branch
      %35 = sbr.rel (0) target = $region17
    $region16: #{tpu_custom_call.1} parent=1 // pred_region
      %36 = dma.done [#allocation5], 3840
    $region17: #{tpu_custom_call.1} parent=1 // pred_fallthru
      _
    %v38 = vld [vmem:[#allocation2] sm:$0xf]
    %v39 = vpack.c.bf16 %v38, %v38
    %v40 = vld [vmem:[#allocation4] sm:$0xff]
    %v41 = vld [vmem:[#allocation4 + $0x8] sm:$0xff]
    %v42 = vld [vmem:[#allocation4 + $0x10] sm:$0xff]
    %v43 = vld [vmem:[#allocation4 + $0x18] sm:$0xff]
    %v44 = vld [vmem:[#allocation4 + $0x20] sm:$0xff]
    %v45 = vld [vmem:[#allocation4 + $0x28] sm:$0xff]
    %v46 = vld [vmem:[#allocation4 + $0x30] sm:$0xff]
    %v47 = vld [vmem:[#allocation4 + $0x38] sm:$0xff]
    %v48 = vld [vmem:[#allocation4 + $0x40] sm:$0x11]
    %v49 = vunpack.c.l.bf16 %v48
    %v50 = vunpack.c.h.bf16 %v48
    %v51 = vlaneseq
    %v52 = vshrl.u32 %v51, 7
    %v53 = vsub.s32 0, %v52
    %v54 = vrot.slane %v49, %v53
    %v55 = vlaneseq
    %v56 = vshrl.u32 %v55, 7
    %v57 = vsub.s32 0, %v56
    %v58 = vrot.slane %v50, %v57
    %v67 = vunpack.c.l.b16 %v40
    %v68 = vunpack.c.h.b16 %v40
    %v69 = vunpack.c.l.b16 %v41
    %v70 = vunpack.c.h.b16 %v41
    %v71 = vunpack.c.l.b16 %v42
    %v72 = vunpack.c.h.b16 %v42
    %v73 = vunpack.c.l.b16 %v43
    %v74 = vunpack.c.h.b16 %v43
    %v75 = vunpack.c.l.b16 %v44
    %v76 = vunpack.c.h.b16 %v44
    %v77 = vunpack.c.l.b16 %v45
    %v78 = vunpack.c.h.b16 %v45
    %v79 = vunpack.c.l.b16 %v46
    %v80 = vunpack.c.h.b16 %v46
    %v81 = vunpack.c.l.b16 %v47
    %v82 = vunpack.c.h.b16 %v47
    %v83 = vpack.c.b16 %v69, %v67
    %v84 = vpack.c.b16 %v70, %v68
    %v85 = vpack.c.b16 %v73, %v71
    %v86 = vpack.c.b16 %v74, %v72
    %v87 = vpack.c.b16 %v77, %v75
    %v88 = vpack.c.b16 %v78, %v76
    %v89 = vpack.c.b16 %v81, %v79
    %v90 = vpack.c.b16 %v82, %v80
    %vm99 = vcmask 523264
    %v101 = vsel %vm99, %v39, 0
    %103 = vmatprep.subr.bf16.mxu0 %v84
    %104 = vmatpush1.bf16.msra.mxu0 %v83
    %105 = vmatprep.subr.bf16.mxu0 %v86
    %106 = vmatpush1.bf16.msra.mxu0 %v85
    %107 = vmatprep.subr.bf16.mxu0 %v88
    %108 = vmatpush1.bf16.msra.mxu0 %v87
    %109 = vmatprep.subr.bf16.mxu0 %v90
    %110 = vmatpush1.bf16.msra.mxu0 %v89
    %111 = vmatprep.subr.bf16.mxu0 0
    %112 = vmatpush1.bf16.msra.mxu0 0
    %113 = vmatprep.subr.bf16.mxu0 0
    %114 = vmatpush1.bf16.msra.mxu0 0
    %115 = vmatprep.subr.bf16.mxu0 0
    %116 = vmatpush1.bf16.msra.mxu0 0
    %117 = vmatprep.subr.bf16.mxu0 0
    %118 = vmatpush1.bf16.msra.mxu0 0
    %119 = vmatprep.subr.bf16.mxu0 0
    %120 = vmatpush1.bf16.msra.mxu0 0
    %121 = vmatprep.subr.bf16.mxu0 0
    %122 = vmatpush1.bf16.msra.mxu0 0
    %123 = vmatprep.subr.bf16.mxu0 0
    %124 = vmatpush1.bf16.msra.mxu0 0
    %125 = vmatprep.subr.bf16.mxu0 0
    %126 = vmatpush1.bf16.msra.mxu0 0
    %127 = vmatprep.subr.bf16.mxu0 0
    %128 = vmatpush1.bf16.msra.mxu0 0
    %129 = vmatprep.subr.bf16.mxu0 0
    %130 = vmatpush1.bf16.msra.mxu0 0
    %131 = vmatprep.subr.bf16.mxu0 0
    %132 = vmatpush1.bf16.msra.mxu0 0
    %133 = vmatprep.subr.bf16.mxu0 0
    %134 = vmatpush1.bf16.msra.mxu0 0
    %135 = vmatprep.mubr.bf16.mxu0 0
    %136 = vmatmul.mubr.bf16.gmra.mrb[0].mxu0 %v101
    %v137 = vpop.f32.mrb[0].mxu0
    %v138 = vadd.f32 %v54, %v137
    %v139 = vpop.f32.mrb[0].mxu0
    %v140 = vadd.f32 %v58, %v139
    %v141 = vpop.f32.mrb[0].mxu0
    %v142 = vpop.f32.mrb[0].mxu0
    %143 = vdwg.mxu0
    %v144 = vxor.u32 %v138, 2147483648
    %v145 = vmul.f32 %v144, 1.442695
    %v146 = vpow.pop %v145
    %v147 = vadd.f32 %v146, 1.0
    %v148 = vrcp.pop %v147
    %v149 = vmul.f32 1.0, %v148
    %v150 = vtanh.pop %v140
    %v151 = vmul.f32 %v149, %v150
    %v152 = vtanh.pop %v151
    %154 = vrot.lane.b32.xlu0 %v152, 64
    %v155 = vpop.permute.xlu0 %154
    %v157 = vmul.f32 %v149, %v155
    %v158 = vpack.c.bf16 %v157, %v157
    %v159 = vld [vmem:[#allocation4 + $0x50] sm:$0xff]
    %v160 = vld [vmem:[#allocation4 + $0x58] sm:$0xff]
    %v161 = vld [vmem:[#allocation4 + $0x60] sm:$0xff]
    %v162 = vld [vmem:[#allocation4 + $0x68] sm:$0xff]
    %v163 = vld [vmem:[#allocation4 + $0x70] sm:$0xff]
    %v164 = vld [vmem:[#allocation4 + $0x78] sm:$0xff]
    %v165 = vld [vmem:[#allocation4 + $0x80] sm:$0xff]
    %v166 = vld [vmem:[#allocation4 + $0x88] sm:$0xff]
    %v167 = vld [vmem:[#allocation4 + $0x90] sm:$0x11]
    %v168 = vunpack.c.l.bf16 %v167
    %v169 = vunpack.c.h.bf16 %v167
    %v170 = vlaneseq
    %v171 = vshrl.u32 %v170, 7
    %v172 = vsub.s32 0, %v171
    %v173 = vrot.slane %v168, %v172
    %v174 = vlaneseq
    %v175 = vshrl.u32 %v174, 7
    %v176 = vsub.s32 0, %v175
    %v177 = vrot.slane %v169, %v176
    %179 = vrot.lane.b32.xlu0 %v158, 64
    %v180 = vpop.permute.xlu0 %179
    %v189 = vunpack.c.l.b16 %v159
    %v190 = vunpack.c.h.b16 %v159
    %v191 = vunpack.c.l.b16 %v160
    %v192 = vunpack.c.h.b16 %v160
    %v193 = vunpack.c.l.b16 %v161
    %v194 = vunpack.c.h.b16 %v161
    %v195 = vunpack.c.l.b16 %v162
    %v196 = vunpack.c.h.b16 %v162
    %v197 = vunpack.c.l.b16 %v163
    %v198 = vunpack.c.h.b16 %v163
    %v199 = vunpack.c.l.b16 %v164
    %v200 = vunpack.c.h.b16 %v164
    %v201 = vunpack.c.l.b16 %v165
    %v202 = vunpack.c.h.b16 %v165
    %v203 = vunpack.c.l.b16 %v166
    %v204 = vunpack.c.h.b16 %v166
    %v205 = vpack.c.b16 %v191, %v189
    %v206 = vpack.c.b16 %v192, %v190
    %v207 = vpack.c.b16 %v195, %v193
    %v208 = vpack.c.b16 %v196, %v194
    %v209 = vpack.c.b16 %v199, %v197
    %v210 = vpack.c.b16 %v200, %v198
    %v211 = vpack.c.b16 %v203, %v201
    %v212 = vpack.c.b16 %v204, %v202
    %v222 = vsel %vm99, %v180, 0
    %224 = vmatprep.subr.bf16.mxu0 %v206
    %225 = vmatpush1.bf16.msra.mxu0 %v205
    %226 = vmatprep.subr.bf16.mxu0 %v208
    %227 = vmatpush1.bf16.msra.mxu0 %v207
    %228 = vmatprep.subr.bf16.mxu0 %v210
    %229 = vmatpush1.bf16.msra.mxu0 %v209
    %230 = vmatprep.subr.bf16.mxu0 %v212
    %231 = vmatpush1.bf16.msra.mxu0 %v211
    %232 = vmatprep.subr.bf16.mxu0 0
    %233 = vmatpush1.bf16.msra.mxu0 0
    %234 = vmatprep.subr.bf16.mxu0 0
    %235 = vmatpush1.bf16.msra.mxu0 0
    %236 = vmatprep.subr.bf16.mxu0 0
    %237 = vmatpush1.bf16.msra.mxu0 0
    %238 = vmatprep.subr.bf16.mxu0 0
    %239 = vmatpush1.bf16.msra.mxu0 0
    %240 = vmatprep.subr.bf16.mxu0 0
    %241 = vmatpush1.bf16.msra.mxu0 0
    %242 = vmatprep.subr.bf16.mxu0 0
    %243 = vmatpush1.bf16.msra.mxu0 0
    %244 = vmatprep.subr.bf16.mxu0 0
    %245 = vmatpush1.bf16.msra.mxu0 0
    %246 = vmatprep.subr.bf16.mxu0 0
    %247 = vmatpush1.bf16.msra.mxu0 0
    %248 = vmatprep.subr.bf16.mxu0 0
    %249 = vmatpush1.bf16.msra.mxu0 0
    %250 = vmatprep.subr.bf16.mxu0 0
    %251 = vmatpush1.bf16.msra.mxu0 0
    %252 = vmatprep.subr.bf16.mxu0 0
    %253 = vmatpush1.bf16.msra.mxu0 0
    %254 = vmatprep.subr.bf16.mxu0 0
    %255 = vmatpush1.bf16.msra.mxu0 0
    %256 = vmatprep.mubr.bf16.mxu0 0
    %257 = vmatmul.mubr.bf16.gmra.mrb[0].mxu0 %v222
    %v258 = vpop.f32.mrb[0].mxu0
    %v259 = vadd.f32 %v173, %v258
    %v260 = vpop.f32.mrb[0].mxu0
    %v261 = vadd.f32 %v177, %v260
    %v262 = vpop.f32.mrb[0].mxu0
    %v263 = vpop.f32.mrb[0].mxu0
    %264 = vdwg.mxu0
    %v265 = vxor.u32 %v259, 2147483648
    %v266 = vmul.f32 %v265, 1.442695
    %v267 = vpow.pop %v266
    %v268 = vadd.f32 %v267, 1.0
    %v269 = vrcp.pop %v268
    %v270 = vmul.f32 1.0, %v269
    %v271 = vtanh.pop %v261
    %v272 = vmul.f32 %v270, %v271
    %v273 = vtanh.pop %v272
    %275 = vrot.lane.b32.xlu0 %v273, 64
    %v276 = vpop.permute.xlu0 %275
    %v278 = vmul.f32 %v270, %v276
    %v279 = vpack.c.bf16 %v278, %v278
    %v280 = vld [vmem:[#allocation4 + $0xa0] sm:$0xf]
    %v281 = vld [vmem:[#allocation4 + $0xa8] sm:$0xf]
    %v282 = vld [vmem:[#allocation4 + $0xb0] sm:$0xf]
    %v283 = vld [vmem:[#allocation4 + $0xb8] sm:$0xf]
    %v284 = vld [vmem:[#allocation4 + $0xc0] sm:$0xf]
    %v285 = vld [vmem:[#allocation4 + $0xc8] sm:$0xf]
    %v286 = vld [vmem:[#allocation4 + $0xd0] sm:$0xf]
    %v287 = vld [vmem:[#allocation4 + $0xd8] sm:$0xf]
    %v288 = vld [vmem:[#allocation4 + $0xe0] sm:$0x1]
    %v289 = vunpack.c.l.bf16 %v288
    %v290 = vlaneseq
    %v291 = vshrl.u32 %v290, 7
    %v292 = vsub.s32 0, %v291
    %v293 = vrot.slane %v289, %v292
    %295 = vrot.lane.b32.xlu0 %v279, 64
    %v296 = vpop.permute.xlu0 %295
    %v305 = vunpack.c.l.b16 %v280
    %v306 = vunpack.c.l.b16 %v281
    %v307 = vunpack.c.l.b16 %v282
    %v308 = vunpack.c.l.b16 %v283
    %v309 = vunpack.c.l.b16 %v284
    %v310 = vunpack.c.l.b16 %v285
    %v311 = vunpack.c.l.b16 %v286
    %v312 = vunpack.c.l.b16 %v287
    %v313 = vpack.c.b16 %v306, %v305
    %v314 = vpack.c.b16 %v308, %v307
    %v315 = vpack.c.b16 %v310, %v309
    %v316 = vpack.c.b16 %v312, %v311
    %v322 = vsel %vm99, %v296, 0
    %324 = vmatprep.subr.bf16.mxu0 0
    %325 = vmatpush1.bf16.msra.mxu0 %v313
    %326 = vmatprep.subr.bf16.mxu0 0
    %327 = vmatpush1.bf16.msra.mxu0 %v314
    %328 = vmatprep.subr.bf16.mxu0 0
    %329 = vmatpush1.bf16.msra.mxu0 %v315
    %330 = vmatprep.subr.bf16.mxu0 0
    %331 = vmatpush1.bf16.msra.mxu0 %v316
    %332 = vmatprep.subr.bf16.mxu0 0
    %333 = vmatpush1.bf16.msra.mxu0 0
    %334 = vmatprep.subr.bf16.mxu0 0
    %335 = vmatpush1.bf16.msra.mxu0 0
    %336 = vmatprep.subr.bf16.mxu0 0
    %337 = vmatpush1.bf16.msra.mxu0 0
    %338 = vmatprep.subr.bf16.mxu0 0
    %339 = vmatpush1.bf16.msra.mxu0 0
    %340 = vmatprep.subr.bf16.mxu0 0
    %341 = vmatpush1.bf16.msra.mxu0 0
    %342 = vmatprep.subr.bf16.mxu0 0
    %343 = vmatpush1.bf16.msra.mxu0 0
    %344 = vmatprep.subr.bf16.mxu0 0
    %345 = vmatpush1.bf16.msra.mxu0 0
    %346 = vmatprep.subr.bf16.mxu0 0
    %347 = vmatpush1.bf16.msra.mxu0 0
    %348 = vmatprep.subr.bf16.mxu0 0
    %349 = vmatpush1.bf16.msra.mxu0 0
    %350 = vmatprep.subr.bf16.mxu0 0
    %351 = vmatpush1.bf16.msra.mxu0 0
    %352 = vmatprep.subr.bf16.mxu0 0
    %353 = vmatpush1.bf16.msra.mxu0 0
    %354 = vmatprep.subr.bf16.mxu0 0
    %355 = vmatpush1.bf16.msra.mxu0 0
    %356 = vmatprep.mubr.bf16.mxu0 0
    %357 = vmatmul.mubr.bf16.gmra.mrb[0].mxu0 %v322
    %v358 = vpop.f32.mrb[0].mxu0
    %v359 = vadd.f32 %v293, %v358
    %v360 = vpop.f32.mrb[0].mxu0
    %v361 = vpop.f32.mrb[0].mxu0
    %v362 = vpop.f32.mrb[0].mxu0
    %363 = vdwg.mxu0
    %vm364 = vcmask 11264
    %365 = vst.msk [vmem:[%s2] sm:$0xf] %vm364, %v359
    // Predicated region
    $region18: #{tpu_custom_call.1} parent=1 // pred_check
      _
    $region19: #{tpu_custom_call.1} parent=1 // pred_check_branch
      %367 = sbr.rel (0) target = $region21
    $region20: #{tpu_custom_call.1} parent=1 // pred_region
      _
    $region21: #{tpu_custom_call.1} parent=1 // pred_fallthru
      _
    // Predicated region
    $region22: #{tpu_custom_call.1} parent=1 // pred_check
      _
    $region23: #{tpu_custom_call.1} parent=1 // pred_check_branch
      %369 = sbr.rel (0) target = $region25
    $region24: #{tpu_custom_call.1} parent=1 // pred_region
      _
    $region25: #{tpu_custom_call.1} parent=1 // pred_fallthru
      _
    %370 = vsyncpa [#allocation3], 1
    %371 = vsyncpa [#allocation5], 1

</llo_original>
